<compile_context>
chip_gen: v5e
topology: v5e:2x2
jax: 0.10.0
libtpu: 0.0.40
codegen_flags: <defaults>
</compile_context>

<pallas_src>
import jax
import jax.numpy as jnp
from jax.experimental import pallas as pl
from jax.experimental.pallas import tpu as pltpu

LANE = 128  # TPU lane width; all feature dims are padded to this.


# ----------------------------- fused kernel -----------------------------------

def make_fused_kernel(B, N, D, n_phi, n_head):
    """phi (Linear+ReLU stack) + weighted pooling + rho/fc (Linear+ReLU+BN) +
    classify (Linear+Sigmoid), all in one invocation."""

    def kernel(b0_ref, w_ref, phiw_ref, phiv_ref, headw_ref, headv_ref, out_ref):
        # ---- phi on all B*N set elements as one stacked matmul per layer ----
        # In-kernel lane pad (natural D -> 128) and bf16 cast; no host pad.
        # NOTE: the (B, N, D) -> (B*N, D) reshape is layout-trivial when N is a
        # multiple of the sublane count (8), which holds for the demo shapes.
        x0 = b0_ref[...].reshape(B * N, D).astype(jnp.bfloat16)
        h = jnp.concatenate(
            [x0, jnp.zeros((B * N, LANE - D), jnp.bfloat16)], axis=-1)
        for i in range(n_phi):                                     # static unroll
            w = phiw_ref[i * LANE:(i + 1) * LANE, :]               # (128,128) bf16
            b = phiv_ref[i:i + 1, :]                               # (1,128) f32
            h = jnp.maximum(
                jnp.dot(h.astype(jnp.bfloat16), w,
                        preferred_element_type=jnp.float32) + b, 0.0)

        # ---- DeepSet weighted pooling: VPU multiply + sublane reduce over N ----
        hr = h.reshape(B, N, LANE)                                 # f32
        pooled = jnp.sum(w_ref[...] * hr, axis=1)                  # (B, 128) f32

        # ---- rho + fc: Linear (bf16 MXU, f32 acc) + ReLU + BatchNorm (train) ----
        y = pooled
        vi = 0
        for i in range(n_head):
            w = headw_ref[i * LANE:(i + 1) * LANE, :]              # (128,128) bf16
            b = headv_ref[vi:vi + 1, :]
            g = headv_ref[vi + 1:vi + 2, :]
            be = headv_ref[vi + 2:vi + 3, :]
            vi += 3
            y = jnp.maximum(
                jnp.dot(y.astype(jnp.bfloat16), w,
                        preferred_element_type=jnp.float32) + b, 0.0)
            mu = jnp.mean(y, axis=0, keepdims=True)
            var = jnp.mean((y - mu) ** 2, axis=0, keepdims=True)
            y = (y - mu) * jax.lax.rsqrt(var + 1e-5) * g + be      # f32 elementwise

        # ---- classify: Linear (bf16 MXU) + Sigmoid; lane-dense store ----
        cw = headw_ref[n_head * LANE:(n_head + 1) * LANE, :]
        cb = headv_ref[vi:vi + 1, :]
        out_ref[...] = jax.nn.sigmoid(
            jnp.dot(y.astype(jnp.bfloat16), cw,
                    preferred_element_type=jnp.float32) + cb)

    return kernel


# ----------------------------- param packing ----------------------------------

def _pad_mat(w):
    r, c = w.shape
    assert r <= LANE and c <= LANE
    return jnp.zeros((LANE, LANE), jnp.float32).at[:r, :c].set(w.astype(jnp.float32))


def _pad_vec(v):
    v = jnp.asarray(v).reshape(-1)
    assert v.shape[0] <= LANE
    return jnp.zeros((1, LANE), jnp.float32).at[0, :v.shape[0]].set(v.astype(jnp.float32))


def _pad_rows(m, mult=8):
    r = m.shape[0]
    rp = -(-r // mult) * mult
    return jnp.zeros((rp, m.shape[1]), m.dtype).at[:r].set(m)


def pack_params(params):
    """Pack all tiny tensors into lane-dense slabs (done ONCE, not per forward).

    Invariant: padded lanes of gamma/beta/bias/weight MUST stay zero so
    Linear/ReLU/BatchNorm exactly preserve the zero-padding of feature columns
    (the rsqrt(eps) blow-up on zero-variance padded columns is multiplied by 0).
    _pad_vec/_pad_mat guarantee this by construction.
    """
    # phi: weights -> one bf16 slab (MXU operands); biases -> f32 row slab.
    phi_w = jnp.concatenate([_pad_mat(w) for (w, _) in params["phi"]],
                            axis=0).astype(jnp.bfloat16)
    phi_v = _pad_rows(jnp.concatenate([_pad_vec(b) for (_, b) in params["phi"]], axis=0))

    head_layers = params["rho"] + params["fc"]
    w_blocks = [_pad_mat(w) for (w, _, _, _) in head_layers]
    v_rows = []
    for (_, b, g, be) in head_layers:
        v_rows += [_pad_vec(b), _pad_vec(g), _pad_vec(be)]
    cw, cb = params["classify"]
    w_blocks.append(_pad_mat(cw))
    v_rows.append(_pad_vec(cb))
    head_w = jnp.concatenate(w_blocks, axis=0).astype(jnp.bfloat16)  # bf16 MXU operands
    head_v = _pad_rows(jnp.concatenate(v_rows, axis=0))              # f32 (BN math)
    return phi_w, phi_v, head_w, head_v


# ----------------------------- wrapper -----------------------------------------

def persnet_forward(b0, b0_weight, packed, n_phi, n_head_bn):
    """b0: (B, N, D); b0_weight: (B, N, 1) -> (B, 1) sigmoid outputs."""
    B, N, D = b0.shape
    assert D <= LANE
    assert b0_weight.shape == (B, N, 1)
    phi_w, phi_v, head_w, head_v = packed

    # VMEM budget: whole-array blocks (no pipelining) + intermediates + headroom,
    # capped at 48 MiB so v7x (64 MiB VMEM) keeps compiler scratch headroom.
    total = (b0.size * 4 + b0_weight.size * 4 +
             phi_w.size * 2 + phi_v.size * 4 +
             head_w.size * 2 + head_v.size * 4 +
             B * N * LANE * 4 + B * LANE * 4)
    vmem_limit = int(min(48 << 20, max(16 << 20, 2 * total + (2 << 20))))

    vmem = pl.BlockSpec(memory_space=pltpu.MemorySpace.VMEM)
    out = pl.pallas_call(
        make_fused_kernel(B, N, D, n_phi, n_head_bn),
        out_shape=jax.ShapeDtypeStruct((B, LANE), jnp.float32),
        in_specs=[vmem] * 6,
        out_specs=vmem,
        compiler_params=pltpu.CompilerParams(vmem_limit_bytes=vmem_limit),
    )(b0.astype(jnp.float32), b0_weight.astype(jnp.float32),
      phi_w, phi_v, head_w, head_v)

    return out[:, :1]                                               # (B, 1)


# ----------------------------- params -------------------------------------------

def init_linear(key, d_in, d_out):
    # PyTorch nn.Linear default init: U(-1/sqrt(fan_in), 1/sqrt(fan_in)).
    k1, k2 = jax.random.split(key)
    bound = 1.0 / (d_in ** 0.5)
    w = jax.random.uniform(k1, (d_in, d_out), jnp.float32, -bound, bound)
    b = jax.random.uniform(k2, (1, d_out), jnp.float32, -bound, bound)
    return w, b


def init_params(key, b0_dim, phi_layers, rho_layers, fc_layers):
    n_lin = len(phi_layers) + len(rho_layers) + len(fc_layers) + 1
    keys = iter(jax.random.split(key, n_lin))
    params = {"phi": [], "rho": [], "fc": []}
    d_in = b0_dim
    for d_out in phi_layers:
        params["phi"].append(init_linear(next(keys), d_in, d_out))
        d_in = d_out
    d_in = phi_layers[-1]
    for d_out in rho_layers:
        w, b = init_linear(next(keys), d_in, d_out)
        params["rho"].append((w, b, jnp.ones((1, d_out), jnp.float32),
                              jnp.zeros((1, d_out), jnp.float32)))
        d_in = d_out
    d_in = rho_layers[-1]
    for d_out in fc_layers:
        w, b = init_linear(next(keys), d_in, d_out)
        params["fc"].append((w, b, jnp.ones((1, d_out), jnp.float32),
                             jnp.zeros((1, d_out), jnp.float32)))
        d_in = d_out
    params["classify"] = init_linear(next(keys), fc_layers[-1], 1)
    return params


# ----------------------------- reference (pure JAX) -----------------------------

def persnet_reference(b0, b0_weight, params, dot_dtype=jnp.float32):
    """Pure-JAX forward.  dot_dtype=bf16 matches the kernel's MXU precision."""
    def mm(a, w):
        return jnp.dot(a.astype(dot_dtype), w.astype(dot_dtype),
                       preferred_element_type=jnp.float32)

    def bn(x, g, b, eps=1e-5):
        mu = x.mean(0, keepdims=True)
        var = ((x - mu) ** 2).mean(0, keepdims=True)
        return (x - mu) / jnp.sqrt(var + eps) * g + b

    x = b0
    for (w, b) in params["phi"]:
        x = jnp.maximum(mm(x, w) + b, 0.0)
    x = (b0_weight * x).sum(axis=1)                                 # (B, F)
    for (w, b, g, be) in params["rho"] + params["fc"]:
        x = bn(jnp.maximum(mm(x, w) + b, 0.0), g, be)
    cw, cb = params["classify"]
    return jax.nn.sigmoid(mm(x, cw) + cb)


# ----------------------------- main ----------------------------------------------

if __name__ == "__main__":
    B, N = 4, 8                 # batch, set size (kNN neighbourhood size)
    B0_DIM = 4                  # persistence-feature dim per set element
    PHI_LAYERS = [32, 16]
    RHO_LAYERS = [32, 16]
    FC_LAYERS = [32, 8]

    key = jax.random.PRNGKey(0)
    k_b0, k_w, k_p = jax.random.split(key, 3)
    b0 = jax.random.normal(k_b0, (B, N, B0_DIM), jnp.float32)
    b0_weight = jax.random.uniform(k_w, (B, N, 1), jnp.float32)

    params = init_params(k_p, B0_DIM, PHI_LAYERS, RHO_LAYERS, FC_LAYERS)
    packed = pack_params(params)                                    # once, not per call

    out = persnet_forward(b0, b0_weight, packed,
                          n_phi=len(PHI_LAYERS),
                          n_head_bn=len(RHO_LAYERS) + len(FC_LAYERS))
    out = jax.block_until_ready(out)

    assert out.shape == (B, 1)
    assert bool(jnp.all(jnp.isfinite(out)))

    # Kernel uses bf16 MXU operands (f32 accumulation) for phi AND the head ->
    # compare tightly against a precision-matched reference, loosely vs pure f32.
    ref_mixed = persnet_reference(b0, b0_weight, params, dot_dtype=jnp.bfloat16)
    ref_f32 = persnet_reference(b0, b0_weight, params, dot_dtype=jnp.float32)
    assert jnp.allclose(out, ref_mixed, rtol=1e-2, atol=2e-3), (out, ref_mixed)
    assert jnp.allclose(out, ref_f32, rtol=1e-1, atol=1e-1), (out, ref_f32)

    print("KERNEL_OK")
</pallas_src>

<mosaic_0001>
module attributes {stable_mosaic.version = 11 : i64} {
  func.func @kernel(%arg0: memref<4x8x4xf32, #tpu.memory_space<vmem>>, %arg1: memref<4x8x1xf32, #tpu.memory_space<vmem>>, %arg2: memref<256x128xbf16, #tpu.memory_space<vmem>>, %arg3: memref<8x128xf32, #tpu.memory_space<vmem>>, %arg4: memref<640x128xbf16, #tpu.memory_space<vmem>>, %arg5: memref<16x128xf32, #tpu.memory_space<vmem>>, %arg6: memref<4x128xf32, #tpu.memory_space<vmem>>) attributes {dimension_semantics = [], scalar_prefetch = 0 : i64, scratch_operands = 0 : i64, tpu.core_type = #tpu.core_type<tc>} {
    %c0 = arith.constant 0 : index
    %c0_0 = arith.constant 0 : index
    %c0_1 = arith.constant 0 : index
    %0 = vector.load %arg0[%c0, %c0_0, %c0_1] : memref<4x8x4xf32, #tpu.memory_space<vmem>>, vector<4x8x4xf32>
    %1 = vector.shape_cast %0 : vector<4x8x4xf32> to vector<32x4xf32>
    %2 = arith.truncf %1 : vector<32x4xf32> to vector<32x4xbf16>
    %cst = arith.constant 0.000000e+00 : bf16
    %3 = vector.broadcast %cst : bf16 to vector<32x124xbf16>
    %4 = tpu.concatenate %2, %3 in 1 : vector<32x4xbf16>, vector<32x124xbf16> -> vector<32x128xbf16>
    %c0_2 = arith.constant 0 : index
    %c0_3 = arith.constant 0 : index
    %5 = vector.load %arg2[%c0_2, %c0_3] : memref<256x128xbf16, #tpu.memory_space<vmem>>, vector<128x128xbf16>
    %c0_4 = arith.constant 0 : index
    %c0_5 = arith.constant 0 : index
    %6 = vector.load %arg3[%c0_4, %c0_5] : memref<8x128xf32, #tpu.memory_space<vmem>>, vector<1x128xf32>
    %cst_6 = arith.constant dense<0.000000e+00> : vector<32x128xf32>
    %7 = tpu.matmul %4, %5, %cst_6 {dimension_numbers = #tpu.dot_dimension_numbers<[1], [0], [0], [1], [0, 0, 1, 1], [], []>} : vector<32x128xbf16>, vector<128x128xbf16>, vector<32x128xf32> -> vector<32x128xf32>
    %8 = vector.broadcast %6 : vector<1x128xf32> to vector<32x128xf32>
    %9 = arith.addf %7, %8 : vector<32x128xf32>
    %cst_7 = arith.constant 0.000000e+00 : f32
    %10 = vector.broadcast %cst_7 : f32 to vector<32x128xf32>
    %11 = arith.maximumf %9, %10 : vector<32x128xf32>
    %c128 = arith.constant 128 : index
    %c0_8 = arith.constant 0 : index
    %12 = vector.load %arg2[%c128, %c0_8] : memref<256x128xbf16, #tpu.memory_space<vmem>>, vector<128x128xbf16>
    %c1 = arith.constant 1 : index
    %c0_9 = arith.constant 0 : index
    %13 = vector.load %arg3[%c1, %c0_9] : memref<8x128xf32, #tpu.memory_space<vmem>>, vector<1x128xf32>
    %14 = arith.truncf %11 : vector<32x128xf32> to vector<32x128xbf16>
    %cst_10 = arith.constant dense<0.000000e+00> : vector<32x128xf32>
    %15 = tpu.matmul %14, %12, %cst_10 {dimension_numbers = #tpu.dot_dimension_numbers<[1], [0], [0], [1], [0, 0, 1, 1], [], []>} : vector<32x128xbf16>, vector<128x128xbf16>, vector<32x128xf32> -> vector<32x128xf32>
    %16 = vector.broadcast %13 : vector<1x128xf32> to vector<32x128xf32>
    %17 = arith.addf %15, %16 : vector<32x128xf32>
    %cst_11 = arith.constant 0.000000e+00 : f32
    %18 = vector.broadcast %cst_11 : f32 to vector<32x128xf32>
    %19 = arith.maximumf %17, %18 : vector<32x128xf32>
    %20 = vector.shape_cast %19 : vector<32x128xf32> to vector<4x8x128xf32>
    %c0_12 = arith.constant 0 : index
    %c0_13 = arith.constant 0 : index
    %c0_14 = arith.constant 0 : index
    %21 = vector.load %arg1[%c0_12, %c0_13, %c0_14] : memref<4x8x1xf32, #tpu.memory_space<vmem>>, vector<4x8x1xf32>
    %22 = vector.broadcast %21 : vector<4x8x1xf32> to vector<4x8x128xf32>
    %23 = arith.mulf %22, %20 : vector<4x8x128xf32>
    %cst_15 = arith.constant dense<0.000000e+00> : vector<4x128xf32>
    %24 = vector.multi_reduction <add>, %23, %cst_15 [1] : vector<4x8x128xf32> to vector<4x128xf32>
    %c0_16 = arith.constant 0 : index
    %c0_17 = arith.constant 0 : index
    %25 = vector.load %arg4[%c0_16, %c0_17] : memref<640x128xbf16, #tpu.memory_space<vmem>>, vector<128x128xbf16>
    %c0_18 = arith.constant 0 : index
    %c0_19 = arith.constant 0 : index
    %26 = vector.load %arg5[%c0_18, %c0_19] : memref<16x128xf32, #tpu.memory_space<vmem>>, vector<1x128xf32>
    %c1_20 = arith.constant 1 : index
    %c0_21 = arith.constant 0 : index
    %27 = vector.load %arg5[%c1_20, %c0_21] : memref<16x128xf32, #tpu.memory_space<vmem>>, vector<1x128xf32>
    %c2 = arith.constant 2 : index
    %c0_22 = arith.constant 0 : index
    %28 = vector.load %arg5[%c2, %c0_22] : memref<16x128xf32, #tpu.memory_space<vmem>>, vector<1x128xf32>
    %29 = arith.truncf %24 : vector<4x128xf32> to vector<4x128xbf16>
    %cst_23 = arith.constant dense<0.000000e+00> : vector<4x128xf32>
    %30 = tpu.matmul %29, %25, %cst_23 {dimension_numbers = #tpu.dot_dimension_numbers<[1], [0], [0], [1], [0, 0, 1, 1], [], []>} : vector<4x128xbf16>, vector<128x128xbf16>, vector<4x128xf32> -> vector<4x128xf32>
    %31 = vector.broadcast %26 : vector<1x128xf32> to vector<4x128xf32>
    %32 = arith.addf %30, %31 : vector<4x128xf32>
    %cst_24 = arith.constant 0.000000e+00 : f32
    %33 = vector.broadcast %cst_24 : f32 to vector<4x128xf32>
    %34 = arith.maximumf %32, %33 : vector<4x128xf32>
    %cst_25 = arith.constant dense<0.000000e+00> : vector<128xf32>
    %35 = vector.multi_reduction <add>, %34, %cst_25 [0] : vector<4x128xf32> to vector<128xf32>
    %36 = vector.shape_cast %35 : vector<128xf32> to vector<1x128xf32>
    %cst_26 = arith.constant 4.000000e+00 : f32
    %37 = vector.broadcast %cst_26 : f32 to vector<1x128xf32>
    %38 = arith.divf %36, %37 : vector<1x128xf32>
    %39 = vector.broadcast %38 : vector<1x128xf32> to vector<4x128xf32>
    %40 = arith.subf %34, %39 : vector<4x128xf32>
    %41 = arith.mulf %40, %40 : vector<4x128xf32>
    %cst_27 = arith.constant dense<0.000000e+00> : vector<128xf32>
    %42 = vector.multi_reduction <add>, %41, %cst_27 [0] : vector<4x128xf32> to vector<128xf32>
    %43 = vector.shape_cast %42 : vector<128xf32> to vector<1x128xf32>
    %cst_28 = arith.constant 4.000000e+00 : f32
    %44 = vector.broadcast %cst_28 : f32 to vector<1x128xf32>
    %45 = arith.divf %43, %44 : vector<1x128xf32>
    %46 = vector.broadcast %38 : vector<1x128xf32> to vector<4x128xf32>
    %47 = arith.subf %34, %46 : vector<4x128xf32>
    %cst_29 = arith.constant 9.99999974E-6 : f32
    %48 = vector.broadcast %cst_29 : f32 to vector<1x128xf32>
    %49 = arith.addf %45, %48 : vector<1x128xf32>
    %50 = math.rsqrt %49 : vector<1x128xf32>
    %51 = vector.broadcast %50 : vector<1x128xf32> to vector<4x128xf32>
    %52 = arith.mulf %47, %51 : vector<4x128xf32>
    %53 = vector.broadcast %27 : vector<1x128xf32> to vector<4x128xf32>
    %54 = arith.mulf %52, %53 : vector<4x128xf32>
    %55 = vector.broadcast %28 : vector<1x128xf32> to vector<4x128xf32>
    %56 = arith.addf %54, %55 : vector<4x128xf32>
    %c128_30 = arith.constant 128 : index
    %c0_31 = arith.constant 0 : index
    %57 = vector.load %arg4[%c128_30, %c0_31] : memref<640x128xbf16, #tpu.memory_space<vmem>>, vector<128x128xbf16>
    %c3 = arith.constant 3 : index
    %c0_32 = arith.constant 0 : index
    %58 = vector.load %arg5[%c3, %c0_32] : memref<16x128xf32, #tpu.memory_space<vmem>>, vector<1x128xf32>
    %c4 = arith.constant 4 : index
    %c0_33 = arith.constant 0 : index
    %59 = vector.load %arg5[%c4, %c0_33] : memref<16x128xf32, #tpu.memory_space<vmem>>, vector<1x128xf32>
    %c5 = arith.constant 5 : index
    %c0_34 = arith.constant 0 : index
    %60 = vector.load %arg5[%c5, %c0_34] : memref<16x128xf32, #tpu.memory_space<vmem>>, vector<1x128xf32>
    %61 = arith.truncf %56 : vector<4x128xf32> to vector<4x128xbf16>
    %cst_35 = arith.constant dense<0.000000e+00> : vector<4x128xf32>
    %62 = tpu.matmul %61, %57, %cst_35 {dimension_numbers = #tpu.dot_dimension_numbers<[1], [0], [0], [1], [0, 0, 1, 1], [], []>} : vector<4x128xbf16>, vector<128x128xbf16>, vector<4x128xf32> -> vector<4x128xf32>
    %63 = vector.broadcast %58 : vector<1x128xf32> to vector<4x128xf32>
    %64 = arith.addf %62, %63 : vector<4x128xf32>
    %cst_36 = arith.constant 0.000000e+00 : f32
    %65 = vector.broadcast %cst_36 : f32 to vector<4x128xf32>
    %66 = arith.maximumf %64, %65 : vector<4x128xf32>
    %cst_37 = arith.constant dense<0.000000e+00> : vector<128xf32>
    %67 = vector.multi_reduction <add>, %66, %cst_37 [0] : vector<4x128xf32> to vector<128xf32>
    %68 = vector.shape_cast %67 : vector<128xf32> to vector<1x128xf32>
    %cst_38 = arith.constant 4.000000e+00 : f32
    %69 = vector.broadcast %cst_38 : f32 to vector<1x128xf32>
    %70 = arith.divf %68, %69 : vector<1x128xf32>
    %71 = vector.broadcast %70 : vector<1x128xf32> to vector<4x128xf32>
    %72 = arith.subf %66, %71 : vector<4x128xf32>
    %73 = arith.mulf %72, %72 : vector<4x128xf32>
    %cst_39 = arith.constant dense<0.000000e+00> : vector<128xf32>
    %74 = vector.multi_reduction <add>, %73, %cst_39 [0] : vector<4x128xf32> to vector<128xf32>
    %75 = vector.shape_cast %74 : vector<128xf32> to vector<1x128xf32>
    %cst_40 = arith.constant 4.000000e+00 : f32
    %76 = vector.broadcast %cst_40 : f32 to vector<1x128xf32>
    %77 = arith.divf %75, %76 : vector<1x128xf32>
    %78 = vector.broadcast %70 : vector<1x128xf32> to vector<4x128xf32>
    %79 = arith.subf %66, %78 : vector<4x128xf32>
    %cst_41 = arith.constant 9.99999974E-6 : f32
    %80 = vector.broadcast %cst_41 : f32 to vector<1x128xf32>
    %81 = arith.addf %77, %80 : vector<1x128xf32>
    %82 = math.rsqrt %81 : vector<1x128xf32>
    %83 = vector.broadcast %82 : vector<1x128xf32> to vector<4x128xf32>
    %84 = arith.mulf %79, %83 : vector<4x128xf32>
    %85 = vector.broadcast %59 : vector<1x128xf32> to vector<4x128xf32>
    %86 = arith.mulf %84, %85 : vector<4x128xf32>
    %87 = vector.broadcast %60 : vector<1x128xf32> to vector<4x128xf32>
    %88 = arith.addf %86, %87 : vector<4x128xf32>
    %c256 = arith.constant 256 : index
    %c0_42 = arith.constant 0 : index
    %89 = vector.load %arg4[%c256, %c0_42] : memref<640x128xbf16, #tpu.memory_space<vmem>>, vector<128x128xbf16>
    %c6 = arith.constant 6 : index
    %c0_43 = arith.constant 0 : index
    %90 = vector.load %arg5[%c6, %c0_43] : memref<16x128xf32, #tpu.memory_space<vmem>>, vector<1x128xf32>
    %c7 = arith.constant 7 : index
    %c0_44 = arith.constant 0 : index
    %91 = vector.load %arg5[%c7, %c0_44] : memref<16x128xf32, #tpu.memory_space<vmem>>, vector<1x128xf32>
    %c8 = arith.constant 8 : index
    %c0_45 = arith.constant 0 : index
    %92 = vector.load %arg5[%c8, %c0_45] : memref<16x128xf32, #tpu.memory_space<vmem>>, vector<1x128xf32>
    %93 = arith.truncf %88 : vector<4x128xf32> to vector<4x128xbf16>
    %cst_46 = arith.constant dense<0.000000e+00> : vector<4x128xf32>
    %94 = tpu.matmul %93, %89, %cst_46 {dimension_numbers = #tpu.dot_dimension_numbers<[1], [0], [0], [1], [0, 0, 1, 1], [], []>} : vector<4x128xbf16>, vector<128x128xbf16>, vector<4x128xf32> -> vector<4x128xf32>
    %95 = vector.broadcast %90 : vector<1x128xf32> to vector<4x128xf32>
    %96 = arith.addf %94, %95 : vector<4x128xf32>
    %cst_47 = arith.constant 0.000000e+00 : f32
    %97 = vector.broadcast %cst_47 : f32 to vector<4x128xf32>
    %98 = arith.maximumf %96, %97 : vector<4x128xf32>
    %cst_48 = arith.constant dense<0.000000e+00> : vector<128xf32>
    %99 = vector.multi_reduction <add>, %98, %cst_48 [0] : vector<4x128xf32> to vector<128xf32>
    %100 = vector.shape_cast %99 : vector<128xf32> to vector<1x128xf32>
    %cst_49 = arith.constant 4.000000e+00 : f32
    %101 = vector.broadcast %cst_49 : f32 to vector<1x128xf32>
    %102 = arith.divf %100, %101 : vector<1x128xf32>
    %103 = vector.broadcast %102 : vector<1x128xf32> to vector<4x128xf32>
    %104 = arith.subf %98, %103 : vector<4x128xf32>
    %105 = arith.mulf %104, %104 : vector<4x128xf32>
    %cst_50 = arith.constant dense<0.000000e+00> : vector<128xf32>
    %106 = vector.multi_reduction <add>, %105, %cst_50 [0] : vector<4x128xf32> to vector<128xf32>
    %107 = vector.shape_cast %106 : vector<128xf32> to vector<1x128xf32>
    %cst_51 = arith.constant 4.000000e+00 : f32
    %108 = vector.broadcast %cst_51 : f32 to vector<1x128xf32>
    %109 = arith.divf %107, %108 : vector<1x128xf32>
    %110 = vector.broadcast %102 : vector<1x128xf32> to vector<4x128xf32>
    %111 = arith.subf %98, %110 : vector<4x128xf32>
    %cst_52 = arith.constant 9.99999974E-6 : f32
    %112 = vector.broadcast %cst_52 : f32 to vector<1x128xf32>
    %113 = arith.addf %109, %112 : vector<1x128xf32>
    %114 = math.rsqrt %113 : vector<1x128xf32>
    %115 = vector.broadcast %114 : vector<1x128xf32> to vector<4x128xf32>
    %116 = arith.mulf %111, %115 : vector<4x128xf32>
    %117 = vector.broadcast %91 : vector<1x128xf32> to vector<4x128xf32>
    %118 = arith.mulf %116, %117 : vector<4x128xf32>
    %119 = vector.broadcast %92 : vector<1x128xf32> to vector<4x128xf32>
    %120 = arith.addf %118, %119 : vector<4x128xf32>
    %c384 = arith.constant 384 : index
    %c0_53 = arith.constant 0 : index
    %121 = vector.load %arg4[%c384, %c0_53] : memref<640x128xbf16, #tpu.memory_space<vmem>>, vector<128x128xbf16>
    %c9 = arith.constant 9 : index
    %c0_54 = arith.constant 0 : index
    %122 = vector.load %arg5[%c9, %c0_54] : memref<16x128xf32, #tpu.memory_space<vmem>>, vector<1x128xf32>
    %c10 = arith.constant 10 : index
    %c0_55 = arith.constant 0 : index
    %123 = vector.load %arg5[%c10, %c0_55] : memref<16x128xf32, #tpu.memory_space<vmem>>, vector<1x128xf32>
    %c11 = arith.constant 11 : index
    %c0_56 = arith.constant 0 : index
    %124 = vector.load %arg5[%c11, %c0_56] : memref<16x128xf32, #tpu.memory_space<vmem>>, vector<1x128xf32>
    %125 = arith.truncf %120 : vector<4x128xf32> to vector<4x128xbf16>
    %cst_57 = arith.constant dense<0.000000e+00> : vector<4x128xf32>
    %126 = tpu.matmul %125, %121, %cst_57 {dimension_numbers = #tpu.dot_dimension_numbers<[1], [0], [0], [1], [0, 0, 1, 1], [], []>} : vector<4x128xbf16>, vector<128x128xbf16>, vector<4x128xf32> -> vector<4x128xf32>
    %127 = vector.broadcast %122 : vector<1x128xf32> to vector<4x128xf32>
    %128 = arith.addf %126, %127 : vector<4x128xf32>
    %cst_58 = arith.constant 0.000000e+00 : f32
    %129 = vector.broadcast %cst_58 : f32 to vector<4x128xf32>
    %130 = arith.maximumf %128, %129 : vector<4x128xf32>
    %cst_59 = arith.constant dense<0.000000e+00> : vector<128xf32>
    %131 = vector.multi_reduction <add>, %130, %cst_59 [0] : vector<4x128xf32> to vector<128xf32>
    %132 = vector.shape_cast %131 : vector<128xf32> to vector<1x128xf32>
    %cst_60 = arith.constant 4.000000e+00 : f32
    %133 = vector.broadcast %cst_60 : f32 to vector<1x128xf32>
    %134 = arith.divf %132, %133 : vector<1x128xf32>
    %135 = vector.broadcast %134 : vector<1x128xf32> to vector<4x128xf32>
    %136 = arith.subf %130, %135 : vector<4x128xf32>
    %137 = arith.mulf %136, %136 : vector<4x128xf32>
    %cst_61 = arith.constant dense<0.000000e+00> : vector<128xf32>
    %138 = vector.multi_reduction <add>, %137, %cst_61 [0] : vector<4x128xf32> to vector<128xf32>
    %139 = vector.shape_cast %138 : vector<128xf32> to vector<1x128xf32>
    %cst_62 = arith.constant 4.000000e+00 : f32
    %140 = vector.broadcast %cst_62 : f32 to vector<1x128xf32>
    %141 = arith.divf %139, %140 : vector<1x128xf32>
    %142 = vector.broadcast %134 : vector<1x128xf32> to vector<4x128xf32>
    %143 = arith.subf %130, %142 : vector<4x128xf32>
    %cst_63 = arith.constant 9.99999974E-6 : f32
    %144 = vector.broadcast %cst_63 : f32 to vector<1x128xf32>
    %145 = arith.addf %141, %144 : vector<1x128xf32>
    %146 = math.rsqrt %145 : vector<1x128xf32>
    %147 = vector.broadcast %146 : vector<1x128xf32> to vector<4x128xf32>
    %148 = arith.mulf %143, %147 : vector<4x128xf32>
    %149 = vector.broadcast %123 : vector<1x128xf32> to vector<4x128xf32>
    %150 = arith.mulf %148, %149 : vector<4x128xf32>
    %151 = vector.broadcast %124 : vector<1x128xf32> to vector<4x128xf32>
    %152 = arith.addf %150, %151 : vector<4x128xf32>
    %c512 = arith.constant 512 : index
    %c0_64 = arith.constant 0 : index
    %153 = vector.load %arg4[%c512, %c0_64] : memref<640x128xbf16, #tpu.memory_space<vmem>>, vector<128x128xbf16>
    %c12 = arith.constant 12 : index
    %c0_65 = arith.constant 0 : index
    %154 = vector.load %arg5[%c12, %c0_65] : memref<16x128xf32, #tpu.memory_space<vmem>>, vector<1x128xf32>
    %155 = arith.truncf %152 : vector<4x128xf32> to vector<4x128xbf16>
    %cst_66 = arith.constant dense<0.000000e+00> : vector<4x128xf32>
    %156 = tpu.matmul %155, %153, %cst_66 {dimension_numbers = #tpu.dot_dimension_numbers<[1], [0], [0], [1], [0, 0, 1, 1], [], []>} : vector<4x128xbf16>, vector<128x128xbf16>, vector<4x128xf32> -> vector<4x128xf32>
    %157 = vector.broadcast %154 : vector<1x128xf32> to vector<4x128xf32>
    %158 = arith.addf %156, %157 : vector<4x128xf32>
    %159 = arith.negf %158 : vector<4x128xf32>
    %160 = math.exp %159 : vector<4x128xf32>
    %cst_67 = arith.constant 1.000000e+00 : f32
    %161 = vector.broadcast %cst_67 : f32 to vector<4x128xf32>
    %162 = arith.addf %161, %160 : vector<4x128xf32>
    %163 = arith.divf %161, %162 : vector<4x128xf32>
    %c0_68 = arith.constant 0 : index
    %c0_69 = arith.constant 0 : index
    %164 = vector.load %arg6[%c0_68, %c0_69] : memref<4x128xf32, #tpu.memory_space<vmem>>, vector<4x128xf32>
    tpu.vector_store %arg6[%c0_68, %c0_69], %163 {strides = array<i32>} : memref<4x128xf32, #tpu.memory_space<vmem>>, vector<4x128xf32>,
    return
  }
}

</mosaic_0001>

<llo_original>
// kernel: tpu_custom_call.1
$region0: #{tpu_custom_call.1}
  #allocation0 [shape = 'u32[]', space=smem, size = 0x4, offset = 0x4, fixed_abs, tag = 'smem constant byte address 0x4 - core index']
  #allocation1 [shape = 'u32[72,128]{1,0:T(1,128)}', space=vmem, size = 0x9000, scoped, tag = 'internal scratch']
  %s0 = inlined_call_operand.vmem [shape: f32[4,8,4], index: 0, kind: input, shape index: {}]
  %s1 = inlined_call_operand.vmem [shape: f32[4,8,1], index: 1, kind: input, shape index: {}]
  %s2 = inlined_call_operand.hbm [shape: bf16[256,128], index: 2, kind: input, shape index: {}]
  %s3 = inlined_call_operand.vmem [shape: f32[8,128], index: 3, kind: input, shape index: {}]
  %s4 = inlined_call_operand.hbm [shape: bf16[640,128], index: 4, kind: input, shape index: {}]
  %s5 = inlined_call_operand.vmem [shape: f32[16,128], index: 5, kind: input, shape index: {}]
  %s6 = inlined_call_operand.hbm [shape: f32[4,128], index: 6, kind: output, shape index: {}]
  %s7 = sld [smem:[#allocation0]]
  $region42: #{tpu_custom_call.1} parent=0
    _
  %s9 = ssub.s32 1, %s7
  %s10 = scalar_select 0, %s9, %s7
  $region1: #{tpu_custom_call.1} parent=0
    #allocation2 [shape = 'u8[65536]{0}', space=vmem, size = 0x10000, scoped, tag = 'input window, operand 2, single buffered']
    #allocation3 [shape = 's32[1]{0}', space=sflag, size = 0x4, scoped, tag = 'scoped memory for tpu_custom_call.1']
    #allocation4 [shape = 's32[1]{0}', space=sflag, size = 0x4, scoped, tag = 'scoped memory for tpu_custom_call.1']
    #allocation5 [shape = 'u8[163840]{0}', space=vmem, size = 0x28000, scoped, tag = 'input window, operand 4, single buffered']
    #allocation6 [shape = 's32[1]{0}', space=sflag, size = 0x4, scoped, tag = 'scoped memory for tpu_custom_call.1']
    #allocation7 [shape = 'u8[2048]{0}', space=vmem, size = 0x800, scoped, tag = 'output window, operand 0, single buffered']
    %11 = vsyncpa [#allocation3], 0
    %12 = vsyncpa [#allocation6], 0
    %13 = vsyncpa [#allocation4], 0
    // Predicated region
    $region2: #{tpu_custom_call.1} parent=1 // pred_check
      _
    $region3: #{tpu_custom_call.1} parent=1 // pred_check_branch
      %15 = sbr.rel (0) target = $region5
    $region4: #{tpu_custom_call.1} parent=1 // pred_region
      _
    $region5: #{tpu_custom_call.1} parent=1 // pred_fallthru
      _
    // Predicated region
    $region6: #{tpu_custom_call.1} parent=1 // pred_check
      _
    $region7: #{tpu_custom_call.1} parent=1 // pred_check_branch
      %17 = sbr.rel (0) target = $region9
    $region8: #{tpu_custom_call.1} parent=1 // pred_region
      _
    $region9: #{tpu_custom_call.1} parent=1 // pred_fallthru
      _
    // Predicated region
    $region10: #{tpu_custom_call.1} parent=1 // pred_check
      _
    $region11: #{tpu_custom_call.1} parent=1 // pred_check_branch
      %19 = sbr.rel (0) target = $region13
    $region12: #{tpu_custom_call.1} parent=1 // pred_region
      %21 = vsyncadd [#allocation3], 0
      %s22 = sshll.u32 %s2, 4
      %s23 = int_to_ptr.hbm [resolvable:$true] %s22
      %s24 = sshll.u32 [#allocation2], 4
      %s25 = int_to_ptr.vmem [resolvable:$true] %s24
      %30 = dma.hbm_to_vmem [thread:$0]  %s23, 2048, %s25, [#allocation3], 64, 64, 4
    $region13: #{tpu_custom_call.1} parent=1 // pred_fallthru
      _
    // Predicated region
    $region14: #{tpu_custom_call.1} parent=1 // pred_check
      _
    $region15: #{tpu_custom_call.1} parent=1 // pred_check_branch
      %32 = sbr.rel (0) target = $region17
    $region16: #{tpu_custom_call.1} parent=1 // pred_region
      _
    $region17: #{tpu_custom_call.1} parent=1 // pred_fallthru
      _
    // Predicated region
    $region18: #{tpu_custom_call.1} parent=1 // pred_check
      _
    $region19: #{tpu_custom_call.1} parent=1 // pred_check_branch
      %34 = sbr.rel (0) target = $region21
    $region20: #{tpu_custom_call.1} parent=1 // pred_region
      %36 = vsyncadd [#allocation6], 0
      %s37 = sshll.u32 %s4, 4
      %s38 = int_to_ptr.hbm [resolvable:$true] %s37
      %s39 = sshll.u32 [#allocation5], 4
      %s40 = int_to_ptr.vmem [resolvable:$true] %s39
      %45 = dma.hbm_to_vmem [thread:$0]  %s38, 5120, %s40, [#allocation6], 64, 64, 4
    $region21: #{tpu_custom_call.1} parent=1 // pred_fallthru
      _
    // Predicated region
    $region22: #{tpu_custom_call.1} parent=1 // pred_check
      _
    $region23: #{tpu_custom_call.1} parent=1 // pred_check_branch
      %47 = sbr.rel (0) target = $region25
    $region24: #{tpu_custom_call.1} parent=1 // pred_region
      _
    $region25: #{tpu_custom_call.1} parent=1 // pred_fallthru
      _
    // Predicated region
    $region26: #{tpu_custom_call.1} parent=1 // pred_check
      _
    $region27: #{tpu_custom_call.1} parent=1 // pred_check_branch
      %49 = sbr.rel (0) target = $region29
    $region28: #{tpu_custom_call.1} parent=1 // pred_region
      %51 = dma.done [#allocation3], 2048
    $region29: #{tpu_custom_call.1} parent=1 // pred_fallthru
      _
    // Predicated region
    $region30: #{tpu_custom_call.1} parent=1 // pred_check
      _
    $region31: #{tpu_custom_call.1} parent=1 // pred_check_branch
      %53 = sbr.rel (0) target = $region33
    $region32: #{tpu_custom_call.1} parent=1 // pred_region
      %55 = dma.done [#allocation6], 5120
    $region33: #{tpu_custom_call.1} parent=1 // pred_fallthru
      _
    %v57 = vld [vmem:[%s0] sm:$0xff]
    %v58 = vld [vmem:[%s0 + $0x8] sm:$0xff]
    %v59 = vld [vmem:[%s0 + $0x10] sm:$0xff]
    %v60 = vld [vmem:[%s0 + $0x18] sm:$0xff]
    %v61 = vpack.c.bf16 %v57, %v57
    %v62 = vpack.c.bf16 %v58, %v58
    %v63 = vpack.c.bf16 %v59, %v59
    %v64 = vpack.c.bf16 %v60, %v60
    %v69 = vunpack.c.l.b16 %v61
    %v70 = vunpack.c.l.b16 %v62
    %v71 = vunpack.c.l.b16 %v63
    %v72 = vunpack.c.l.b16 %v64
    %v73 = vpack.c.b16 %v70, %v69
    %v74 = vpack.c.b16 %v72, %v71
    %vm75 = vcmask 31744
    %v78 = vsel %vm75, %v73, 0
    %v81 = vsel %vm75, %v74, 0
    %v83 = vld [vmem:[#allocation2] sm:$0xf]
    %v84 = vld [vmem:[#allocation2 + $0x4] sm:$0xf]
    %v85 = vld [vmem:[#allocation2 + $0x8] sm:$0xf]
    %v86 = vld [vmem:[#allocation2 + $0xc] sm:$0xf]
    %v87 = vld [vmem:[#allocation2 + $0x10] sm:$0xf]
    %v88 = vld [vmem:[#allocation2 + $0x14] sm:$0xf]
    %v89 = vld [vmem:[#allocation2 + $0x18] sm:$0xf]
    %v90 = vld [vmem:[#allocation2 + $0x1c] sm:$0xf]
    %v91 = vld [vmem:[#allocation2 + $0x20] sm:$0xf]
    %v92 = vld [vmem:[#allocation2 + $0x24] sm:$0xf]
    %v93 = vld [vmem:[#allocation2 + $0x28] sm:$0xf]
    %v94 = vld [vmem:[#allocation2 + $0x2c] sm:$0xf]
    %v95 = vld [vmem:[#allocation2 + $0x30] sm:$0xf]
    %v96 = vld [vmem:[#allocation2 + $0x34] sm:$0xf]
    %v97 = vld [vmem:[#allocation2 + $0x38] sm:$0xf]
    %v98 = vld [vmem:[#allocation2 + $0x3c] sm:$0xf]
    %v99 = vld [vmem:[%s3] sm:$0x1]
    %v100 = vperm.slane %v99, 0
    %v117 = vunpack.c.l.b16 %v83
    %v118 = vunpack.c.l.b16 %v84
    %v119 = vunpack.c.l.b16 %v85
    %v120 = vunpack.c.l.b16 %v86
    %v121 = vunpack.c.l.b16 %v87
    %v122 = vunpack.c.l.b16 %v88
    %v123 = vunpack.c.l.b16 %v89
    %v124 = vunpack.c.l.b16 %v90
    %v125 = vunpack.c.l.b16 %v91
    %v126 = vunpack.c.l.b16 %v92
    %v127 = vunpack.c.l.b16 %v93
    %v128 = vunpack.c.l.b16 %v94
    %v129 = vunpack.c.l.b16 %v95
    %v130 = vunpack.c.l.b16 %v96
    %v131 = vunpack.c.l.b16 %v97
    %v132 = vunpack.c.l.b16 %v98
    %v133 = vpack.c.b16 %v118, %v117
    %v134 = vpack.c.b16 %v120, %v119
    %v135 = vpack.c.b16 %v122, %v121
    %v136 = vpack.c.b16 %v124, %v123
    %v137 = vpack.c.b16 %v126, %v125
    %v138 = vpack.c.b16 %v128, %v127
    %v139 = vpack.c.b16 %v130, %v129
    %v140 = vpack.c.b16 %v132, %v131
    %149 = vmatpush.bf16.msra.mxu0 %v140
    %150 = vmatpush.bf16.msra.mxu0 %v139
    %151 = vmatpush.bf16.msra.mxu0 %v138
    %152 = vmatpush.bf16.msra.mxu0 %v137
    %153 = vmatpush.bf16.msra.mxu0 %v136
    %154 = vmatpush.bf16.msra.mxu0 %v135
    %155 = vmatpush.bf16.msra.mxu0 %v134
    %156 = vmatpush.bf16.msra.mxu0 %v133
    %157 = vmatmul.bf16.gmra.mxu0 %v78
    %v158 = vpop.f32.mrf.mxu0
    %v159 = vadd.f32 %v100, %v158
    %v160 = vpop.f32.mrf.mxu0
    %v161 = vadd.f32 %v100, %v160
    %162 = vmatmul.bf16.gmra.mxu0 %v81
    %v163 = vpop.f32.mrf.mxu0
    %v164 = vadd.f32 %v100, %v163
    %v165 = vpop.f32.mrf.mxu0
    %v166 = vadd.f32 %v100, %v165
    %167 = vdwg.mxu0
    %v168 = vmax.f32 %v159, 0.0
    %v169 = vmax.f32 %v161, 0.0
    %v170 = vmax.f32 %v164, 0.0
    %v171 = vmax.f32 %v166, 0.0
    %v172 = vld [vmem:[#allocation2 + $0x40] sm:$0xf]
    %v173 = vld [vmem:[#allocation2 + $0x44] sm:$0xf]
    %v174 = vld [vmem:[#allocation2 + $0x48] sm:$0xf]
    %v175 = vld [vmem:[#allocation2 + $0x4c] sm:$0xf]
    %v176 = vld [vmem:[#allocation2 + $0x50] sm:$0xf]
    %v177 = vld [vmem:[#allocation2 + $0x54] sm:$0xf]
    %v178 = vld [vmem:[#allocation2 + $0x58] sm:$0xf]
    %v179 = vld [vmem:[#allocation2 + $0x5c] sm:$0xf]
    %v180 = vld [vmem:[#allocation2 + $0x60] sm:$0xf]
    %v181 = vld [vmem:[#allocation2 + $0x64] sm:$0xf]
    %v182 = vld [vmem:[#allocation2 + $0x68] sm:$0xf]
    %v183 = vld [vmem:[#allocation2 + $0x6c] sm:$0xf]
    %v184 = vld [vmem:[#allocation2 + $0x70] sm:$0xf]
    %v185 = vld [vmem:[#allocation2 + $0x74] sm:$0xf]
    %v186 = vld [vmem:[#allocation2 + $0x78] sm:$0xf]
    %v187 = vld [vmem:[#allocation2 + $0x7c] sm:$0xf]
    %v188 = vld [vmem:[%s3 + $0x1] sm:$0x1]
    %v189 = vpack.c.bf16 %v169, %v168
    %v190 = vpack.c.bf16 %v171, %v170
    %v191 = vperm.slane %v188, 0
    %v208 = vunpack.c.l.b16 %v172
    %v209 = vunpack.c.l.b16 %v173
    %v210 = vunpack.c.l.b16 %v174
    %v211 = vunpack.c.l.b16 %v175
    %v212 = vunpack.c.l.b16 %v176
    %v213 = vunpack.c.l.b16 %v177
    %v214 = vunpack.c.l.b16 %v178
    %v215 = vunpack.c.l.b16 %v179
    %v216 = vunpack.c.l.b16 %v180
    %v217 = vunpack.c.l.b16 %v181
    %v218 = vunpack.c.l.b16 %v182
    %v219 = vunpack.c.l.b16 %v183
    %v220 = vunpack.c.l.b16 %v184
    %v221 = vunpack.c.l.b16 %v185
    %v222 = vunpack.c.l.b16 %v186
    %v223 = vunpack.c.l.b16 %v187
    %v224 = vpack.c.b16 %v209, %v208
    %v225 = vpack.c.b16 %v211, %v210
    %v226 = vpack.c.b16 %v213, %v212
    %v227 = vpack.c.b16 %v215, %v214
    %v228 = vpack.c.b16 %v217, %v216
    %v229 = vpack.c.b16 %v219, %v218
    %v230 = vpack.c.b16 %v221, %v220
    %v231 = vpack.c.b16 %v223, %v222
    %240 = vmatpush.bf16.msra.mxu0 %v231
    %241 = vmatpush.bf16.msra.mxu0 %v230
    %242 = vmatpush.bf16.msra.mxu0 %v229
    %243 = vmatpush.bf16.msra.mxu0 %v228
    %244 = vmatpush.bf16.msra.mxu0 %v227
    %245 = vmatpush.bf16.msra.mxu0 %v226
    %246 = vmatpush.bf16.msra.mxu0 %v225
    %247 = vmatpush.bf16.msra.mxu0 %v224
    %248 = vmatmul.bf16.gmra.mxu0 %v189
    %v249 = vpop.f32.mrf.mxu0
    %v250 = vadd.f32 %v191, %v249
    %v251 = vpop.f32.mrf.mxu0
    %v252 = vadd.f32 %v191, %v251
    %253 = vmatmul.bf16.gmra.mxu0 %v190
    %v254 = vpop.f32.mrf.mxu0
    %v255 = vadd.f32 %v191, %v254
    %v256 = vpop.f32.mrf.mxu0
    %v257 = vadd.f32 %v191, %v256
    %258 = vdwg.mxu0
    %v259 = vmax.f32 %v250, 0.0
    %v260 = vmax.f32 %v252, 0.0
    %v261 = vmax.f32 %v255, 0.0
    %v262 = vmax.f32 %v257, 0.0
    %v263 = vld [vmem:[%s1] sm:$0xff]
    %v264 = vld [vmem:[%s1 + $0x8] sm:$0xff]
    %v265 = vld [vmem:[%s1 + $0x10] sm:$0xff]
    %v266 = vld [vmem:[%s1 + $0x18] sm:$0xff]
    %268 = vset.pattern.permute.xlu0 0
    %269 = vperm.xlu0 %268, %v263
    %v270 = vpop.permute.xlu0 %269
    %273 = vset.pattern.permute.xlu0 0
    %274 = vperm.xlu0 %273, %v264
    %v275 = vpop.permute.xlu0 %274
    %278 = vset.pattern.permute.xlu0 0
    %279 = vperm.xlu0 %278, %v265
    %v280 = vpop.permute.xlu0 %279
    %283 = vset.pattern.permute.xlu0 0
    %284 = vperm.xlu0 %283, %v266
    %v285 = vpop.permute.xlu0 %284
    %v287 = vmul.f32 %v270, %v259
    %v288 = vmul.f32 %v275, %v260
    %v289 = vmul.f32 %v280, %v261
    %v290 = vmul.f32 %v285, %v262
    %v291 = vrot.slane %v287, 4
    %v292 = vadd.f32 %v287, %v291
    %v293 = vrot.slane %v292, 2
    %v294 = vadd.f32 %v292, %v293
    %v295 = vrot.slane %v294, 1
    %v296 = vadd.f32 %v294, %v295
    %v297 = vrot.slane %v288, 4
    %v298 = vadd.f32 %v288, %v297
    %v299 = vrot.slane %v298, 2
    %v300 = vadd.f32 %v298, %v299
    %v301 = vrot.slane %v300, 1
    %v302 = vadd.f32 %v300, %v301
    %v303 = vrot.slane %v289, 4
    %v304 = vadd.f32 %v289, %v303
    %v305 = vrot.slane %v304, 2
    %v306 = vadd.f32 %v304, %v305
    %v307 = vrot.slane %v306, 1
    %v308 = vadd.f32 %v306, %v307
    %v309 = vrot.slane %v290, 4
    %v310 = vadd.f32 %v290, %v309
    %v311 = vrot.slane %v310, 2
    %v312 = vadd.f32 %v310, %v311
    %v313 = vrot.slane %v312, 1
    %v314 = vadd.f32 %v312, %v313
    %v315 = vld [vmem:[#allocation5] sm:$0xf]
    %v316 = vld [vmem:[#allocation5 + $0x4] sm:$0xf]
    %v317 = vld [vmem:[#allocation5 + $0x8] sm:$0xf]
    %v318 = vld [vmem:[#allocation5 + $0xc] sm:$0xf]
    %v319 = vld [vmem:[#allocation5 + $0x10] sm:$0xf]
    %v320 = vld [vmem:[#allocation5 + $0x14] sm:$0xf]
    %v321 = vld [vmem:[#allocation5 + $0x18] sm:$0xf]
    %v322 = vld [vmem:[#allocation5 + $0x1c] sm:$0xf]
    %v323 = vld [vmem:[#allocation5 + $0x20] sm:$0xf]
    %v324 = vld [vmem:[#allocation5 + $0x24] sm:$0xf]
    %v325 = vld [vmem:[#allocation5 + $0x28] sm:$0xf]
    %v326 = vld [vmem:[#allocation5 + $0x2c] sm:$0xf]
    %v327 = vld [vmem:[#allocation5 + $0x30] sm:$0xf]
    %v328 = vld [vmem:[#allocation5 + $0x34] sm:$0xf]
    %v329 = vld [vmem:[#allocation5 + $0x38] sm:$0xf]
    %v330 = vld [vmem:[#allocation5 + $0x3c] sm:$0xf]
    %v331 = vld [vmem:[%s5] sm:$0x1]
    %v332 = vld [vmem:[%s5 + $0x1] sm:$0x1]
    %v333 = vld [vmem:[%s5 + $0x2] sm:$0x1]
    %v334 = vpack.c.bf16 %v296, %v296
    %v335 = vpack.c.bf16 %v302, %v302
    %v336 = vpack.c.bf16 %v308, %v308
    %v337 = vpack.c.bf16 %v314, %v314
    %v338 = vperm.slane %v331, 0
    %v343 = vunpack.c.l.b16 %v334
    %v344 = vunpack.c.l.b16 %v335
    %v345 = vunpack.c.l.b16 %v336
    %v346 = vunpack.c.l.b16 %v337
    %vm347 = vcmask 1041409
    %v348 = vsel %vm347, %v344, %v343
    %vm349 = vcmask 1042434
    %v350 = vsel %vm349, %v345, %v348
    %vm351 = vcmask 1043459
    %v352 = vsel %vm351, %v346, %v350
    %v353 = vpack.c.b16 %v352, %v352
    %v371 = vunpack.c.l.b16 %v315
    %v372 = vunpack.c.l.b16 %v316
    %v373 = vunpack.c.l.b16 %v317
    %v374 = vunpack.c.l.b16 %v318
    %v375 = vunpack.c.l.b16 %v319
    %v376 = vunpack.c.l.b16 %v320
    %v377 = vunpack.c.l.b16 %v321
    %v378 = vunpack.c.l.b16 %v322
    %v379 = vunpack.c.l.b16 %v323
    %v380 = vunpack.c.l.b16 %v324
    %v381 = vunpack.c.l.b16 %v325
    %v382 = vunpack.c.l.b16 %v326
    %v383 = vunpack.c.l.b16 %v327
    %v384 = vunpack.c.l.b16 %v328
    %v385 = vunpack.c.l.b16 %v329
    %v386 = vunpack.c.l.b16 %v330
    %v387 = vpack.c.b16 %v372, %v371
    %v388 = vpack.c.b16 %v374, %v373
    %v389 = vpack.c.b16 %v376, %v375
    %v390 = vpack.c.b16 %v378, %v377
    %v391 = vpack.c.b16 %v380, %v379
    %v392 = vpack.c.b16 %v382, %v381
    %v393 = vpack.c.b16 %v384, %v383
    %v394 = vpack.c.b16 %v386, %v385
    %403 = vmatpush.bf16.msra.mxu0 %v394
    %404 = vmatpush.bf16.msra.mxu0 %v393
    %405 = vmatpush.bf16.msra.mxu0 %v392
    %406 = vmatpush.bf16.msra.mxu0 %v391
    %407 = vmatpush.bf16.msra.mxu0 %v390
    %408 = vmatpush.bf16.msra.mxu0 %v389
    %409 = vmatpush.bf16.msra.mxu0 %v388
    %410 = vmatpush.bf16.msra.mxu0 %v387
    %411 = vmatmul.bf16.gmra.mxu0 %v353
    %v412 = vpop.f32.mrf.mxu0
    %v413 = vadd.f32 %v338, %v412
    %v414 = vpop.f32.mrf.mxu0
    %415 = vdwg.mxu0
    %v416 = vmax.f32 %v413, 0.0
    %vm417 = vcmask 1043456
    %v418 = vsel %vm417, %v416, 0.0
    %v419 = vrot.slane %v418, 4
    %v420 = vadd.f32 %v418, %v419
    %v421 = vrot.slane %v420, 2
    %v422 = vadd.f32 %v420, %v421
    %v423 = vrot.slane %v422, 1
    %v424 = vadd.f32 %v422, %v423
    %v425 = vrcp.pop 4.0
    %v426 = vmul.f32 4.0, %v425
    %v427 = vsub.f32 1.0, %v426
    %v428 = vmul.f32 %v425, %v427
    %v429 = vadd.f32 %v425, %v428
    %vm430 = vweird.f32 %v425
    %v431 = vsel %vm430, %v425, %v429
    %v432 = vmul.f32 %v424, %v431
    %v433 = vsub.f32 %v416, %v432
    %v434 = vmul.f32 %v433, %v433
    %v435 = vsel %vm417, %v434, 0.0
    %v436 = vrot.slane %v435, 4
    %v437 = vadd.f32 %v435, %v436
    %v438 = vrot.slane %v437, 2
    %v439 = vadd.f32 %v437, %v438
    %v440 = vrot.slane %v439, 1
    %v441 = vadd.f32 %v439, %v440
    %v442 = vmul.f32 %v441, %v431
    %v443 = vadd.f32 %v442, 1e-05
    %v444 = vrsqrt.pop %v443
    %v445 = vmul.f32 %v444, %v443
    %v446 = vmul.f32 %v445, %v444
    %v447 = vmul.f32 0.5, %v446
    %v448 = vsub.f32 1.5, %v447
    %v449 = vmul.f32 %v444, %v448
    %vm450 = vweird.f32 %v443
    %vm451 = vweird.f32 %v444
    %vm452 = vmor %vm450, %vm451
    %v453 = vsel %vm452, %v444, %v449
    %v454 = vmul.f32 %v433, %v453
    %v455 = vperm.slane %v332, 0
    %v456 = vmul.f32 %v454, %v455
    %v457 = vperm.slane %v333, 0
    %v458 = vadd.f32 %v456, %v457
    %v459 = vld [vmem:[#allocation5 + $0x40] sm:$0xf]
    %v460 = vld [vmem:[#allocation5 + $0x44] sm:$0xf]
    %v461 = vld [vmem:[#allocation5 + $0x48] sm:$0xf]
    %v462 = vld [vmem:[#allocation5 + $0x4c] sm:$0xf]
    %v463 = vld [vmem:[#allocation5 + $0x50] sm:$0xf]
    %v464 = vld [vmem:[#allocation5 + $0x54] sm:$0xf]
    %v465 = vld [vmem:[#allocation5 + $0x58] sm:$0xf]
    %v466 = vld [vmem:[#allocation5 + $0x5c] sm:$0xf]
    %v467 = vld [vmem:[#allocation5 + $0x60] sm:$0xf]
    %v468 = vld [vmem:[#allocation5 + $0x64] sm:$0xf]
    %v469 = vld [vmem:[#allocation5 + $0x68] sm:$0xf]
    %v470 = vld [vmem:[#allocation5 + $0x6c] sm:$0xf]
    %v471 = vld [vmem:[#allocation5 + $0x70] sm:$0xf]
    %v472 = vld [vmem:[#allocation5 + $0x74] sm:$0xf]
    %v473 = vld [vmem:[#allocation5 + $0x78] sm:$0xf]
    %v474 = vld [vmem:[#allocation5 + $0x7c] sm:$0xf]
    %v475 = vld [vmem:[%s5 + $0x3] sm:$0x1]
    %v476 = vld [vmem:[%s5 + $0x4] sm:$0x1]
    %v477 = vld [vmem:[%s5 + $0x5] sm:$0x1]
    %v478 = vpack.c.bf16 %v458, %v458
    %v479 = vperm.slane %v475, 0
    %v496 = vunpack.c.l.b16 %v459
    %v497 = vunpack.c.l.b16 %v460
    %v498 = vunpack.c.l.b16 %v461
    %v499 = vunpack.c.l.b16 %v462
    %v500 = vunpack.c.l.b16 %v463
    %v501 = vunpack.c.l.b16 %v464
    %v502 = vunpack.c.l.b16 %v465
    %v503 = vunpack.c.l.b16 %v466
    %v504 = vunpack.c.l.b16 %v467
    %v505 = vunpack.c.l.b16 %v468
    %v506 = vunpack.c.l.b16 %v469
    %v507 = vunpack.c.l.b16 %v470
    %v508 = vunpack.c.l.b16 %v471
    %v509 = vunpack.c.l.b16 %v472
    %v510 = vunpack.c.l.b16 %v473
    %v511 = vunpack.c.l.b16 %v474
    %v512 = vpack.c.b16 %v497, %v496
    %v513 = vpack.c.b16 %v499, %v498
    %v514 = vpack.c.b16 %v501, %v500
    %v515 = vpack.c.b16 %v503, %v502
    %v516 = vpack.c.b16 %v505, %v504
    %v517 = vpack.c.b16 %v507, %v506
    %v518 = vpack.c.b16 %v509, %v508
    %v519 = vpack.c.b16 %v511, %v510
    %528 = vmatpush.bf16.msra.mxu0 %v519
    %529 = vmatpush.bf16.msra.mxu0 %v518
    %530 = vmatpush.bf16.msra.mxu0 %v517
    %531 = vmatpush.bf16.msra.mxu0 %v516
    %532 = vmatpush.bf16.msra.mxu0 %v515
    %533 = vmatpush.bf16.msra.mxu0 %v514
    %534 = vmatpush.bf16.msra.mxu0 %v513
    %535 = vmatpush.bf16.msra.mxu0 %v512
    %536 = vmatmul.bf16.gmra.mxu0 %v478
    %v537 = vpop.f32.mrf.mxu0
    %v538 = vadd.f32 %v479, %v537
    %v539 = vpop.f32.mrf.mxu0
    %540 = vdwg.mxu0
    %v541 = vmax.f32 %v538, 0.0
    %v542 = vsel %vm417, %v541, 0.0
    %v543 = vrot.slane %v542, 4
    %v544 = vadd.f32 %v542, %v543
    %v545 = vrot.slane %v544, 2
    %v546 = vadd.f32 %v544, %v545
    %v547 = vrot.slane %v546, 1
    %v548 = vadd.f32 %v546, %v547
    %v549 = vmul.f32 %v548, %v431
    %v550 = vsub.f32 %v541, %v549
    %v551 = vmul.f32 %v550, %v550
    %v552 = vsel %vm417, %v551, 0.0
    %v553 = vrot.slane %v552, 4
    %v554 = vadd.f32 %v552, %v553
    %v555 = vrot.slane %v554, 2
    %v556 = vadd.f32 %v554, %v555
    %v557 = vrot.slane %v556, 1
    %v558 = vadd.f32 %v556, %v557
    %v559 = vmul.f32 %v558, %v431
    %v560 = vadd.f32 %v559, 1e-05
    %v561 = vrsqrt.pop %v560
    %v562 = vmul.f32 %v561, %v560
    %v563 = vmul.f32 %v562, %v561
    %v564 = vmul.f32 0.5, %v563
    %v565 = vsub.f32 1.5, %v564
    %v566 = vmul.f32 %v561, %v565
    %vm567 = vweird.f32 %v560
    %vm568 = vweird.f32 %v561
    %vm569 = vmor %vm567, %vm568
    %v570 = vsel %vm569, %v561, %v566
    %v571 = vmul.f32 %v550, %v570
    %v572 = vperm.slane %v476, 0
    %v573 = vmul.f32 %v571, %v572
    %v574 = vperm.slane %v477, 0
    %v575 = vadd.f32 %v573, %v574
    %v576 = vld [vmem:[#allocation5 + $0x80] sm:$0xf]
    %v577 = vld [vmem:[#allocation5 + $0x84] sm:$0xf]
    %v578 = vld [vmem:[#allocation5 + $0x88] sm:$0xf]
    %v579 = vld [vmem:[#allocation5 + $0x8c] sm:$0xf]
    %v580 = vld [vmem:[#allocation5 + $0x90] sm:$0xf]
    %v581 = vld [vmem:[#allocation5 + $0x94] sm:$0xf]
    %v582 = vld [vmem:[#allocation5 + $0x98] sm:$0xf]
    %v583 = vld [vmem:[#allocation5 + $0x9c] sm:$0xf]
    %v584 = vld [vmem:[#allocation5 + $0xa0] sm:$0xf]
    %v585 = vld [vmem:[#allocation5 + $0xa4] sm:$0xf]
    %v586 = vld [vmem:[#allocation5 + $0xa8] sm:$0xf]
    %v587 = vld [vmem:[#allocation5 + $0xac] sm:$0xf]
    %v588 = vld [vmem:[#allocation5 + $0xb0] sm:$0xf]
    %v589 = vld [vmem:[#allocation5 + $0xb4] sm:$0xf]
    %v590 = vld [vmem:[#allocation5 + $0xb8] sm:$0xf]
    %v591 = vld [vmem:[#allocation5 + $0xbc] sm:$0xf]
    %v592 = vld [vmem:[%s5 + $0x6] sm:$0x1]
    %v593 = vld [vmem:[%s5 + $0x7] sm:$0x1]
    %v594 = vld [vmem:[%s5 + $0x8] sm:$0x1]
    %v595 = vpack.c.bf16 %v575, %v575
    %v596 = vperm.slane %v592, 0
    %v613 = vunpack.c.l.b16 %v576
    %v614 = vunpack.c.l.b16 %v577
    %v615 = vunpack.c.l.b16 %v578
    %v616 = vunpack.c.l.b16 %v579
    %v617 = vunpack.c.l.b16 %v580
    %v618 = vunpack.c.l.b16 %v581
    %v619 = vunpack.c.l.b16 %v582
    %v620 = vunpack.c.l.b16 %v583
    %v621 = vunpack.c.l.b16 %v584
    %v622 = vunpack.c.l.b16 %v585
    %v623 = vunpack.c.l.b16 %v586
    %v624 = vunpack.c.l.b16 %v587
    %v625 = vunpack.c.l.b16 %v588
    %v626 = vunpack.c.l.b16 %v589
    %v627 = vunpack.c.l.b16 %v590
    %v628 = vunpack.c.l.b16 %v591
    %v629 = vpack.c.b16 %v614, %v613
    %v630 = vpack.c.b16 %v616, %v615
    %v631 = vpack.c.b16 %v618, %v617
    %v632 = vpack.c.b16 %v620, %v619
    %v633 = vpack.c.b16 %v622, %v621
    %v634 = vpack.c.b16 %v624, %v623
    %v635 = vpack.c.b16 %v626, %v625
    %v636 = vpack.c.b16 %v628, %v627
    %645 = vmatpush.bf16.msra.mxu0 %v636
    %646 = vmatpush.bf16.msra.mxu0 %v635
    %647 = vmatpush.bf16.msra.mxu0 %v634
    %648 = vmatpush.bf16.msra.mxu0 %v633
    %649 = vmatpush.bf16.msra.mxu0 %v632
    %650 = vmatpush.bf16.msra.mxu0 %v631
    %651 = vmatpush.bf16.msra.mxu0 %v630
    %652 = vmatpush.bf16.msra.mxu0 %v629
    %653 = vmatmul.bf16.gmra.mxu0 %v595
    %v654 = vpop.f32.mrf.mxu0
    %v655 = vadd.f32 %v596, %v654
    %v656 = vpop.f32.mrf.mxu0
    %657 = vdwg.mxu0
    %v658 = vmax.f32 %v655, 0.0
    %v659 = vsel %vm417, %v658, 0.0
    %v660 = vrot.slane %v659, 4
    %v661 = vadd.f32 %v659, %v660
    %v662 = vrot.slane %v661, 2
    %v663 = vadd.f32 %v661, %v662
    %v664 = vrot.slane %v663, 1
    %v665 = vadd.f32 %v663, %v664
    %v666 = vmul.f32 %v665, %v431
    %v667 = vsub.f32 %v658, %v666
    %v668 = vmul.f32 %v667, %v667
    %v669 = vsel %vm417, %v668, 0.0
    %v670 = vrot.slane %v669, 4
    %v671 = vadd.f32 %v669, %v670
    %v672 = vrot.slane %v671, 2
    %v673 = vadd.f32 %v671, %v672
    %v674 = vrot.slane %v673, 1
    %v675 = vadd.f32 %v673, %v674
    %v676 = vmul.f32 %v675, %v431
    %v677 = vadd.f32 %v676, 1e-05
    %v678 = vrsqrt.pop %v677
    %v679 = vmul.f32 %v678, %v677
    %v680 = vmul.f32 %v679, %v678
    %v681 = vmul.f32 0.5, %v680
    %v682 = vsub.f32 1.5, %v681
    %v683 = vmul.f32 %v678, %v682
    %vm684 = vweird.f32 %v677
    %vm685 = vweird.f32 %v678
    %vm686 = vmor %vm684, %vm685
    %v687 = vsel %vm686, %v678, %v683
    %v688 = vmul.f32 %v667, %v687
    %v689 = vperm.slane %v593, 0
    %v690 = vmul.f32 %v688, %v689
    %v691 = vperm.slane %v594, 0
    %v692 = vadd.f32 %v690, %v691
    %v693 = vld [vmem:[#allocation5 + $0xc0] sm:$0xf]
    %v694 = vld [vmem:[#allocation5 + $0xc4] sm:$0xf]
    %v695 = vld [vmem:[#allocation5 + $0xc8] sm:$0xf]
    %v696 = vld [vmem:[#allocation5 + $0xcc] sm:$0xf]
    %v697 = vld [vmem:[#allocation5 + $0xd0] sm:$0xf]
    %v698 = vld [vmem:[#allocation5 + $0xd4] sm:$0xf]
    %v699 = vld [vmem:[#allocation5 + $0xd8] sm:$0xf]
    %v700 = vld [vmem:[#allocation5 + $0xdc] sm:$0xf]
    %v701 = vld [vmem:[#allocation5 + $0xe0] sm:$0xf]
    %v702 = vld [vmem:[#allocation5 + $0xe4] sm:$0xf]
    %v703 = vld [vmem:[#allocation5 + $0xe8] sm:$0xf]
    %v704 = vld [vmem:[#allocation5 + $0xec] sm:$0xf]
    %v705 = vld [vmem:[#allocation5 + $0xf0] sm:$0xf]
    %v706 = vld [vmem:[#allocation5 + $0xf4] sm:$0xf]
    %v707 = vld [vmem:[#allocation5 + $0xf8] sm:$0xf]
    %v708 = vld [vmem:[#allocation5 + $0xfc] sm:$0xf]
    %v709 = vld [vmem:[%s5 + $0x9] sm:$0x1]
    %v710 = vld [vmem:[%s5 + $0xa] sm:$0x1]
    %v711 = vld [vmem:[%s5 + $0xb] sm:$0x1]
    %v712 = vpack.c.bf16 %v692, %v692
    %v713 = vperm.slane %v709, 0
    %v730 = vunpack.c.l.b16 %v693
    %v731 = vunpack.c.l.b16 %v694
    %v732 = vunpack.c.l.b16 %v695
    %v733 = vunpack.c.l.b16 %v696
    %v734 = vunpack.c.l.b16 %v697
    %v735 = vunpack.c.l.b16 %v698
    %v736 = vunpack.c.l.b16 %v699
    %v737 = vunpack.c.l.b16 %v700
    %v738 = vunpack.c.l.b16 %v701
    %v739 = vunpack.c.l.b16 %v702
    %v740 = vunpack.c.l.b16 %v703
    %v741 = vunpack.c.l.b16 %v704
    %v742 = vunpack.c.l.b16 %v705
    %v743 = vunpack.c.l.b16 %v706
    %v744 = vunpack.c.l.b16 %v707
    %v745 = vunpack.c.l.b16 %v708
    %v746 = vpack.c.b16 %v731, %v730
    %v747 = vpack.c.b16 %v733, %v732
    %v748 = vpack.c.b16 %v735, %v734
    %v749 = vpack.c.b16 %v737, %v736
    %v750 = vpack.c.b16 %v739, %v738
    %v751 = vpack.c.b16 %v741, %v740
    %v752 = vpack.c.b16 %v743, %v742
    %v753 = vpack.c.b16 %v745, %v744
    %762 = vmatpush.bf16.msra.mxu0 %v753
    %763 = vmatpush.bf16.msra.mxu0 %v752
    %764 = vmatpush.bf16.msra.mxu0 %v751
    %765 = vmatpush.bf16.msra.mxu0 %v750
    %766 = vmatpush.bf16.msra.mxu0 %v749
    %767 = vmatpush.bf16.msra.mxu0 %v748
    %768 = vmatpush.bf16.msra.mxu0 %v747
    %769 = vmatpush.bf16.msra.mxu0 %v746
    %770 = vmatmul.bf16.gmra.mxu0 %v712
    %v771 = vpop.f32.mrf.mxu0
    %v772 = vadd.f32 %v713, %v771
    %v773 = vpop.f32.mrf.mxu0
    %774 = vdwg.mxu0
    %v775 = vmax.f32 %v772, 0.0
    %v776 = vsel %vm417, %v775, 0.0
    %v777 = vrot.slane %v776, 4
    %v778 = vadd.f32 %v776, %v777
    %v779 = vrot.slane %v778, 2
    %v780 = vadd.f32 %v778, %v779
    %v781 = vrot.slane %v780, 1
    %v782 = vadd.f32 %v780, %v781
    %v783 = vmul.f32 %v782, %v431
    %v784 = vsub.f32 %v775, %v783
    %v785 = vmul.f32 %v784, %v784
    %v786 = vsel %vm417, %v785, 0.0
    %v787 = vrot.slane %v786, 4
    %v788 = vadd.f32 %v786, %v787
    %v789 = vrot.slane %v788, 2
    %v790 = vadd.f32 %v788, %v789
    %v791 = vrot.slane %v790, 1
    %v792 = vadd.f32 %v790, %v791
    %v793 = vmul.f32 %v792, %v431
    %v794 = vadd.f32 %v793, 1e-05
    %v795 = vrsqrt.pop %v794
    %v796 = vmul.f32 %v795, %v794
    %v797 = vmul.f32 %v796, %v795
    %v798 = vmul.f32 0.5, %v797
    %v799 = vsub.f32 1.5, %v798
    %v800 = vmul.f32 %v795, %v799
    %vm801 = vweird.f32 %v794
    %vm802 = vweird.f32 %v795
    %vm803 = vmor %vm801, %vm802
    %v804 = vsel %vm803, %v795, %v800
    %v805 = vmul.f32 %v784, %v804
    %v806 = vperm.slane %v710, 0
    %v807 = vmul.f32 %v805, %v806
    %v808 = vperm.slane %v711, 0
    %v809 = vadd.f32 %v807, %v808
    %v810 = vld [vmem:[#allocation5 + $0x100] sm:$0xf]
    %v811 = vld [vmem:[#allocation5 + $0x104] sm:$0xf]
    %v812 = vld [vmem:[#allocation5 + $0x108] sm:$0xf]
    %v813 = vld [vmem:[#allocation5 + $0x10c] sm:$0xf]
    %v814 = vld [vmem:[#allocation5 + $0x110] sm:$0xf]
    %v815 = vld [vmem:[#allocation5 + $0x114] sm:$0xf]
    %v816 = vld [vmem:[#allocation5 + $0x118] sm:$0xf]
    %v817 = vld [vmem:[#allocation5 + $0x11c] sm:$0xf]
    %v818 = vld [vmem:[#allocation5 + $0x120] sm:$0xf]
    %v819 = vld [vmem:[#allocation5 + $0x124] sm:$0xf]
    %v820 = vld [vmem:[#allocation5 + $0x128] sm:$0xf]
    %v821 = vld [vmem:[#allocation5 + $0x12c] sm:$0xf]
    %v822 = vld [vmem:[#allocation5 + $0x130] sm:$0xf]
    %v823 = vld [vmem:[#allocation5 + $0x134] sm:$0xf]
    %v824 = vld [vmem:[#allocation5 + $0x138] sm:$0xf]
    %v825 = vld [vmem:[#allocation5 + $0x13c] sm:$0xf]
    %v826 = vld [vmem:[%s5 + $0xc] sm:$0x1]
    %v827 = vpack.c.bf16 %v809, %v809
    %v828 = vperm.slane %v826, 0
    %v845 = vunpack.c.l.b16 %v810
    %v846 = vunpack.c.l.b16 %v811
    %v847 = vunpack.c.l.b16 %v812
    %v848 = vunpack.c.l.b16 %v813
    %v849 = vunpack.c.l.b16 %v814
    %v850 = vunpack.c.l.b16 %v815
    %v851 = vunpack.c.l.b16 %v816
    %v852 = vunpack.c.l.b16 %v817
    %v853 = vunpack.c.l.b16 %v818
    %v854 = vunpack.c.l.b16 %v819
    %v855 = vunpack.c.l.b16 %v820
    %v856 = vunpack.c.l.b16 %v821
    %v857 = vunpack.c.l.b16 %v822
    %v858 = vunpack.c.l.b16 %v823
    %v859 = vunpack.c.l.b16 %v824
    %v860 = vunpack.c.l.b16 %v825
    %v861 = vpack.c.b16 %v846, %v845
    %v862 = vpack.c.b16 %v848, %v847
    %v863 = vpack.c.b16 %v850, %v849
    %v864 = vpack.c.b16 %v852, %v851
    %v865 = vpack.c.b16 %v854, %v853
    %v866 = vpack.c.b16 %v856, %v855
    %v867 = vpack.c.b16 %v858, %v857
    %v868 = vpack.c.b16 %v860, %v859
    %877 = vmatpush.bf16.msra.mxu0 %v868
    %878 = vmatpush.bf16.msra.mxu0 %v867
    %879 = vmatpush.bf16.msra.mxu0 %v866
    %880 = vmatpush.bf16.msra.mxu0 %v865
    %881 = vmatpush.bf16.msra.mxu0 %v864
    %882 = vmatpush.bf16.msra.mxu0 %v863
    %883 = vmatpush.bf16.msra.mxu0 %v862
    %884 = vmatpush.bf16.msra.mxu0 %v861
    %885 = vmatmul.bf16.gmra.mxu0 %v827
    %v886 = vpop.f32.mrf.mxu0
    %v887 = vadd.f32 %v828, %v886
    %v888 = vpop.f32.mrf.mxu0
    %889 = vdwg.mxu0
    %v890 = vxor.u32 %v887, 2147483648
    %v891 = vmul.f32 %v890, 1.442695
    %v892 = vpow.pop %v891
    %v893 = vadd.f32 %v892, 1.0
    %v894 = vrcp.pop %v893
    %v895 = vmul.f32 %v893, %v894
    %v896 = vsub.f32 1.0, %v895
    %v897 = vmul.f32 %v894, %v896
    %v898 = vadd.f32 %v894, %v897
    %vm899 = vweird.f32 %v893
    %vm900 = vweird.f32 %v894
    %vm901 = vmor %vm899, %vm900
    %v902 = vsel %vm901, %v894, %v898
    %v903 = vand.u32 2147483647, %v893
    %vm904 = vcmp.eq.f32.partialorder %v903, 8.507059e+37
    %v905 = vand.u32 %v893, 2147483648
    %v906 = vor.u32 1.1754944e-38, %v905
    %v907 = vsel %vm904, %v906, %v902
    %v908 = vmul.f32 1.0, %v907
    %909 = vst [vmem:[#allocation7] sm:$0xf] %v908
    // Predicated region
    $region34: #{tpu_custom_call.1} parent=1 // pred_check
      _
    $region35: #{tpu_custom_call.1} parent=1 // pred_check_branch
      %911 = sbr.rel (0) target = $region37
    $region36: #{tpu_custom_call.1} parent=1 // pred_region
      %913 = vsyncadd [#allocation4], 0
      %s915 = sshll.u32 [#allocation7], 4
      %s916 = int_to_ptr.vmem [resolvable:$true] %s915
      %s917 = sshll.u32 %s6, 4
      %s918 = int_to_ptr.hbm [resolvable:$true] %s917
      %920 = dma.vmem_to_hbm [thread:$0]  %s916, 64, %s918, [#allocation4]
    $region37: #{tpu_custom_call.1} parent=1 // pred_fallthru
      _
    // Predicated region
    $region38: #{tpu_custom_call.1} parent=1 // pred_check
      _
    $region39: #{tpu_custom_call.1} parent=1 // pred_check_branch
      %922 = sbr.rel (0) target = $region41
    $region40: #{tpu_custom_call.1} parent=1 // pred_region
      %924 = dma.done [#allocation4], 64
    $region41: #{tpu_custom_call.1} parent=1 // pred_fallthru
      _
    %925 = vsyncpa [#allocation3], 1
    %926 = vsyncpa [#allocation6], 1
    %927 = vsyncpa [#allocation4], 1

</llo_original>
